<compile_context>
chip_gen: v7x
topology: tpu7x:2x2x1
jax: 0.10.0
libtpu: 0.0.40
codegen_flags: <defaults>
</compile_context>

<pallas_src>
import functools

import numpy as np
import jax
import jax.numpy as jnp
from jax import lax
from jax.experimental import pallas as pl
from jax.experimental.pallas import tpu as pltpu


_VMEM_LIMIT_BYTES = 48 * 1024 * 1024  # safe on v7x (64 MiB/TC); generous on v5e/v6e


# ----------------------------------------------------------------------------- helpers
def _round_up(v, m):
    return (v + m - 1) // m * m


def _pad2d(a, rows, cols):
    return jnp.pad(a, ((0, rows - a.shape[0]), (0, cols - a.shape[1])))


# ----------------------------------------------------------------------------- kernels
def _gemm_kernel(x_ref, wt_ref, b_ref, o_ref, *, add_bias, apply_relu):
    """o = [relu]( x @ W^T [+ b] ), tiled over row tiles. bf16 x bf16 -> f32 MXU."""
    h = jnp.dot(x_ref[...], wt_ref[...], preferred_element_type=jnp.float32)
    if add_bias:
        h = h + b_ref[...]
    if apply_relu:
        h = jnp.maximum(h, 0.0)
    o_ref[...] = h.astype(o_ref.dtype)


def _agg_kernel(ktile_ids_ref, nnz_ref, h_ref, adj_ref, b_ref, o_ref, acc_ref,
                *, add_bias, apply_relu):
    """o[i-tile] = [relu]( sum_k adj[i,k] @ h[k] [+ b] ) over non-empty k tiles only.

    ktile_ids/nnz are scalar-prefetched SMEM arrays: ktile_ids[i, k] is the k-th
    occupied column-tile of row-tile i (padded with a repeated valid index), and
    nnz[i] is the number of real entries.  The padded steps still DMA a tile but
    their compute is masked out, so the accumulator stays correct.
    """
    i = pl.program_id(0)
    k = pl.program_id(1)

    @pl.when(k == 0)
    def _init():
        acc_ref[...] = jnp.zeros_like(acc_ref)

    @pl.when(k < nnz_ref[i])
    def _accum():
        # bf16 adjacency tile x bf16 feature tile, f32 accumulate (native MXU rate).
        acc_ref[...] += jnp.dot(adj_ref[...], h_ref[...],
                                preferred_element_type=jnp.float32)

    @pl.when(k == pl.num_programs(1) - 1)
    def _finalize():
        out = acc_ref[...]
        if add_bias:
            out = out + b_ref[...]
        if apply_relu:
            out = jnp.maximum(out, 0.0)
        o_ref[...] = out.astype(o_ref.dtype)


# ----------------------------------------------------------------------------- wrappers
def gemm_pallas(x_pad, wt_pad, b_pad, *, out_dtype, add_bias, apply_relu, tile):
    # TODO(synk): add a reduction grid axis over fin_pad for very wide input features
    # (here fin_pad is small enough to keep X tile and W^T fully VMEM-resident).
    n_pad, fin_pad = x_pad.shape
    fout_pad = wt_pad.shape[1]
    kernel = functools.partial(_gemm_kernel, add_bias=add_bias, apply_relu=apply_relu)
    return pl.pallas_call(
        kernel,
        out_shape=jax.ShapeDtypeStruct((n_pad, fout_pad), out_dtype),
        grid_spec=pltpu.PrefetchScalarGridSpec(
            num_scalar_prefetch=0,
            grid=(n_pad // tile,),
            in_specs=[
                pl.BlockSpec((tile, fin_pad), lambda i: (i, 0)),      # X row tile
                pl.BlockSpec((fin_pad, fout_pad), lambda i: (0, 0)),  # W^T resident
                pl.BlockSpec((1, fout_pad), lambda i: (0, 0)),        # bias
            ],
            out_specs=pl.BlockSpec((tile, fout_pad), lambda i: (i, 0)),
        ),
        compiler_params=pltpu.CompilerParams(
            dimension_semantics=("parallel",),
            vmem_limit_bytes=_VMEM_LIMIT_BYTES,
        ),
    )(x_pad, wt_pad, b_pad)


def agg_pallas(h_pad, adj_bf16, b_pad, ktile_ids, nnz,
               *, out_dtype, add_bias, apply_relu, tile):
    n_pad, f_pad = h_pad.shape
    nrt = n_pad // tile
    max_nnz = ktile_ids.shape[1]
    kernel = functools.partial(_agg_kernel, add_bias=add_bias, apply_relu=apply_relu)
    return pl.pallas_call(
        kernel,
        out_shape=jax.ShapeDtypeStruct((n_pad, f_pad), out_dtype),
        grid_spec=pltpu.PrefetchScalarGridSpec(
            num_scalar_prefetch=2,
            grid=(nrt, max_nnz),
            in_specs=[
                # H rows = adjacency column tile, chosen by the sparse schedule.
                pl.BlockSpec((tile, f_pad), lambda i, k, kt, nn: (kt[i, k], 0)),
                # adj tile (bf16) at (row tile i, occupied column tile kt[i,k]).
                pl.BlockSpec((tile, tile), lambda i, k, kt, nn: (i, kt[i, k])),
                pl.BlockSpec((1, f_pad), lambda i, k, kt, nn: (0, 0)),
            ],
            out_specs=pl.BlockSpec((tile, f_pad), lambda i, k, kt, nn: (i, 0)),
            scratch_shapes=[pltpu.VMEM((tile, f_pad), jnp.float32)],
        ),
        compiler_params=pltpu.CompilerParams(
            dimension_semantics=("parallel", "arbitrary"),
            vmem_limit_bytes=_VMEM_LIMIT_BYTES,
        ),
    )(ktile_ids, nnz, h_pad, adj_bf16, b_pad)


# ----------------------------------------------------------------------------- glue
def build_normalized_adj(edge_index, num_nodes, n_pad):
    """Dense D^{-1/2} (A + I) D^{-1/2}, zero-padded to (n_pad, n_pad). (host/numpy)

    out[dst] += w * h[src]  =>  adj[dst, src] = w, symmetric normalization.
    # TODO(synk): exact gcn_conv normalization (self-loops / degree source) depends on
    # the unshown gcn_conv helper in surrogate_model.py; this follows standard gcn_norm.
    """
    ei = np.asarray(jax.device_get(edge_index))
    src, dst = ei[0].astype(np.int64), ei[1].astype(np.int64)
    loops = np.arange(num_nodes, dtype=np.int64)
    src = np.concatenate([src, loops])
    dst = np.concatenate([dst, loops])
    deg = np.zeros((num_nodes,), np.float32)
    np.add.at(deg, dst, 1.0)
    dinv = np.where(deg > 0, 1.0 / np.sqrt(deg), 0.0).astype(np.float32)
    w = dinv[src] * dinv[dst]
    adj = np.zeros((n_pad, n_pad), np.float32)
    np.add.at(adj, (dst, src), w)
    return adj


def build_tile_schedule(adj_np, tile):
    """Per-row-tile list of occupied column-tile indices (+counts) for scalar prefetch."""
    n_pad = adj_np.shape[0]
    nrt = n_pad // tile
    occ = (adj_np.reshape(nrt, tile, nrt, tile) != 0).any(axis=(1, 3))
    nnz = occ.sum(axis=1).astype(np.int32)
    max_nnz = max(int(nnz.max()), 1)
    ktile_ids = np.zeros((nrt, max_nnz), np.int32)
    for i in range(nrt):
        ids = np.nonzero(occ[i])[0].astype(np.int32)
        m = len(ids)
        if m:
            ktile_ids[i, :m] = ids
            ktile_ids[i, m:] = ids[-1]   # padded entries: valid index, compute masked
    return jnp.asarray(ktile_ids), jnp.asarray(nnz)


def xavier_uniform_t(key, fan_in, fan_out, gain=1.414):
    # PyTorch Linear weight is (fan_out, fan_in); we keep W^T = (fan_in, fan_out)
    # so the forward pass never transposes.
    limit = gain * (6.0 / (fan_in + fan_out)) ** 0.5
    return jax.random.uniform(key, (fan_in, fan_out), jnp.float32, -limit, limit)


def init_params(key, in_channels, hidden_channels, out_channels, num_layers):
    dims = [in_channels] + [hidden_channels] * (num_layers - 1) + [out_channels]
    params = []
    for i in range(num_layers):
        key, sub = jax.random.split(key)
        wt = xavier_uniform_t(sub, dims[i], dims[i + 1])
        b = jnp.zeros((dims[i + 1],), jnp.float32)
        params.append((wt, b))
    return params


def my_gcn_jaccard_forward(x, edge_index, params, use_mp=True, tile=None):
    """Inference forward of MyGCNJaccard. Dropout is identity at eval time.

    # TODO(synk): BatchNorm (self.bns) and the GCNJaccard submodule are constructed
    # in the PyTorch module but never used in its forward(); not modeled here.
    # NOTE: adjacency + tile schedule are built on the host (concrete edge_index);
    # this wrapper is not intended to be traced under jit end-to-end.
    """
    n, fin = x.shape
    if tile is None:
        tile = min(512, _round_up(n, 128))   # 512 keeps wide-fin layers within v7x VMEM
    else:
        tile = _round_up(tile, 128)
    n_pad = _round_up(n, tile)

    fin_pad0 = _round_up(fin, 128)
    xp = _pad2d(x.astype(jnp.float32), n_pad, fin_pad0).astype(jnp.bfloat16)

    adj_bf16 = ktile_ids = nnz = None
    if use_mp:
        adj_np = build_normalized_adj(edge_index, n, n_pad)
        ktile_ids, nnz = build_tile_schedule(adj_np, tile)
        adj_bf16 = jnp.asarray(adj_np).astype(jnp.bfloat16)

    num_layers = len(params)
    for li, (wt, b) in enumerate(params):
        is_last = li == num_layers - 1
        apply_relu = not is_last
        out_dtype = jnp.float32 if is_last else jnp.bfloat16   # bf16 hidden activations
        fi, fo = wt.shape
        fi_pad, fo_pad = _round_up(fi, 128), _round_up(fo, 128)
        wt_p = _pad2d(wt, fi_pad, fo_pad).astype(jnp.bfloat16)
        b_p = jnp.pad(b, (0, fo_pad - fo)).reshape(1, fo_pad).astype(jnp.float32)

        if use_mp:
            if fo_pad <= fi_pad:
                # order A: H = X @ W^T, then adj @ H (+b)(+relu)
                h = gemm_pallas(xp, wt_p, b_p, out_dtype=jnp.bfloat16,
                                add_bias=False, apply_relu=False, tile=tile)
                xp = agg_pallas(h, adj_bf16, b_p, ktile_ids, nnz, out_dtype=out_dtype,
                                add_bias=True, apply_relu=apply_relu, tile=tile)
            else:
                # order B: Z = adj @ X, then Z @ W^T (+b)(+relu)  (narrower O(N^2) width)
                z = agg_pallas(xp, adj_bf16, b_p, ktile_ids, nnz, out_dtype=jnp.bfloat16,
                               add_bias=False, apply_relu=False, tile=tile)
                xp = gemm_pallas(z, wt_p, b_p, out_dtype=out_dtype,
                                 add_bias=True, apply_relu=apply_relu, tile=tile)
        else:
            xp = gemm_pallas(xp, wt_p, b_p, out_dtype=out_dtype,
                             add_bias=True, apply_relu=apply_relu, tile=tile)
        # dropout(p=0.5, training=False) == identity

    fout = params[-1][0].shape[1]
    return xp[:n, :fout].astype(jnp.float32)


# ----------------------------------------------------------------------------- reference
def reference_forward(x, adj_f32, params, use_mp=True):
    """Pure-JAX reference mirroring the kernel's mixed-precision (bf16) strategy so the
    check isolates kernel plumbing (tiling, sparse schedule, epilogues)."""
    hp = lax.Precision.HIGHEST

    def as_bf16(a):
        return a.astype(jnp.bfloat16).astype(jnp.float32)

    adj = as_bf16(adj_f32) if use_mp else None
    h = as_bf16(x)
    num_layers = len(params)
    for li, (wt, b) in enumerate(params):
        is_last = li == num_layers - 1
        wt_b = as_bf16(wt)
        fi, fo = wt.shape
        fi_pad, fo_pad = _round_up(fi, 128), _round_up(fo, 128)
        if use_mp:
            if fo_pad <= fi_pad:
                t = as_bf16(jnp.dot(h, wt_b, precision=hp))
                h = jnp.dot(adj, t, precision=hp) + b
            else:
                t = as_bf16(jnp.dot(adj, h, precision=hp))
                h = jnp.dot(t, wt_b, precision=hp) + b
        else:
            h = jnp.dot(h, wt_b, precision=hp) + b
        if not is_last:
            h = as_bf16(jnp.maximum(h, 0.0))
    return h


# ----------------------------------------------------------------------------- demo
if __name__ == "__main__":
    key = jax.random.PRNGKey(0)
    num_nodes = 320
    in_channels = 16
    hidden_channels = 32
    out_channels = 8
    num_layers = 3
    num_edges = 1280
    tile = 128  # small tile so the demo exercises multi-tile grid + sparse schedule

    kx, k1, k2, k3, k4, kp = jax.random.split(key, 6)
    x = jax.random.normal(kx, (num_nodes, in_channels), jnp.float32)
    # Block-structured random graph: edges only inside [0,100) and [200,320), so some
    # (row-tile, col-tile) adjacency tiles are empty and the tile-skip path is exercised.
    e2 = num_edges // 2
    src = jnp.concatenate([jax.random.randint(k1, (e2,), 0, 100),
                           jax.random.randint(k3, (e2,), 200, num_nodes)])
    dst = jnp.concatenate([jax.random.randint(k2, (e2,), 0, 100),
                           jax.random.randint(k4, (e2,), 200, num_nodes)])
    edge_index = jnp.stack([src, dst], axis=0)  # (2, E)

    params = init_params(kp, in_channels, hidden_channels, out_channels, num_layers)

    # use_mp=True (full GCN propagation with block-sparse adjacency schedule)
    out = my_gcn_jaccard_forward(x, edge_index, params, use_mp=True, tile=tile)
    out = jax.block_until_ready(out)
    assert out.shape == (num_nodes, out_channels)

    adj_ref = jnp.asarray(build_normalized_adj(edge_index, num_nodes, num_nodes))
    ref = reference_forward(x, adj_ref, params, use_mp=True)
    max_err = float(jnp.max(jnp.abs(out - ref)))
    assert max_err < 2e-2, f"mp path max abs err {max_err}"

    # use_mp=False (pure MLP path)
    out_nomp = my_gcn_jaccard_forward(x, edge_index, params, use_mp=False, tile=tile)
    out_nomp = jax.block_until_ready(out_nomp)
    ref_nomp = reference_forward(x, None, params, use_mp=False)
    max_err2 = float(jnp.max(jnp.abs(out_nomp - ref_nomp)))
    assert out_nomp.shape == (num_nodes, out_channels)
    assert max_err2 < 2e-2, f"no-mp path max abs err {max_err2}"

    print("KERNEL_OK")
</pallas_src>

<mosaic_0001>
module attributes {stable_mosaic.version = 11 : i64} {
  func.func @_gemm_kernel(%arg0: i32, %arg1: memref<128x128xbf16, #tpu.memory_space<vmem>>, %arg2: memref<128x128xbf16, #tpu.memory_space<vmem>>, %arg3: memref<1x128xf32, #tpu.memory_space<vmem>>, %arg4: memref<128x128xbf16, #tpu.memory_space<vmem>>) attributes {dimension_semantics = [#tpu.dimension_semantics<parallel>], iteration_bounds = array<i64: 3>, scalar_prefetch = 0 : i64, scratch_operands = 0 : i64, tpu.core_type = #tpu.core_type<tc>, window_params = [{transform_indices = @transform_0, window_bounds = array<i64: 128, 128>}, {pipeline_mode = #tpu.pipeline_mode<synchronous>, transform_indices = @transform_1, window_bounds = array<i64: 128, 128>}, {pipeline_mode = #tpu.pipeline_mode<synchronous>, transform_indices = @transform_2, window_bounds = array<i64: 1, 128>}, {transform_indices = @transform_3, window_bounds = array<i64: 128, 128>}]} {
    %c0 = arith.constant 0 : index
    %c0_0 = arith.constant 0 : index
    %0 = vector.load %arg1[%c0, %c0_0] : memref<128x128xbf16, #tpu.memory_space<vmem>>, vector<128x128xbf16>
    %c0_1 = arith.constant 0 : index
    %c0_2 = arith.constant 0 : index
    %1 = vector.load %arg2[%c0_1, %c0_2] : memref<128x128xbf16, #tpu.memory_space<vmem>>, vector<128x128xbf16>
    %cst = arith.constant dense<0.000000e+00> : vector<128x128xf32>
    %2 = tpu.matmul %0, %1, %cst {dimension_numbers = #tpu.dot_dimension_numbers<[1], [0], [0], [1], [0, 0, 1, 1], [], []>} : vector<128x128xbf16>, vector<128x128xbf16>, vector<128x128xf32> -> vector<128x128xf32>
    %3 = arith.truncf %2 : vector<128x128xf32> to vector<128x128xbf16>
    %c0_3 = arith.constant 0 : index
    %c0_4 = arith.constant 0 : index
    %4 = vector.load %arg4[%c0_3, %c0_4] : memref<128x128xbf16, #tpu.memory_space<vmem>>, vector<128x128xbf16>
    tpu.vector_store %arg4[%c0_3, %c0_4], %3 {strides = array<i32>} : memref<128x128xbf16, #tpu.memory_space<vmem>>, vector<128x128xbf16>,
    return
  }
  func.func @transform_0(%arg0: i32) -> (i32, i32) {
    %c0_i32 = arith.constant 0 : i32
    %c0_i32_0 = arith.constant 0 : i32
    return %arg0, %c0_i32 : i32, i32
  }
  func.func @transform_1(%arg0: i32) -> (i32, i32) {
    %c0_i32 = arith.constant 0 : i32
    %c0_i32_0 = arith.constant 0 : i32
    %c0_i32_1 = arith.constant 0 : i32
    return %c0_i32, %c0_i32_0 : i32, i32
  }
  func.func @transform_2(%arg0: i32) -> (i32, i32) {
    %c0_i32 = arith.constant 0 : i32
    %c0_i32_0 = arith.constant 0 : i32
    %c0_i32_1 = arith.constant 0 : i32
    return %c0_i32, %c0_i32_0 : i32, i32
  }
  func.func @transform_3(%arg0: i32) -> (i32, i32) {
    %c0_i32 = arith.constant 0 : i32
    %c0_i32_0 = arith.constant 0 : i32
    return %arg0, %c0_i32 : i32, i32
  }
}

</mosaic_0001>

<llo_original>
// kernel: tpu_custom_call.1
$region0: #{tpu_custom_call.1}
  #allocation0 [shape = 'u32[]', space=smem, size = 0x4, offset = 0x4, fixed_abs, tag = 'smem constant byte address 0x4 - core index']
  #allocation1 [shape = 'u32[144,128]{1,0:T(1,128)}', space=vmem, size = 0x12000, scoped, tag = 'internal scratch']
  %s0 = inlined_call_operand.hbm [shape: bf16[384,128], index: 0, kind: input, shape index: {}]
  %s1 = inlined_call_operand.hbm [shape: bf16[128,128], index: 1, kind: input, shape index: {}]
  %s2 = inlined_call_operand.vmem [shape: f32[1,128], index: 2, kind: input, shape index: {}]
  %s3 = inlined_call_operand.hbm [shape: bf16[384,128], index: 3, kind: output, shape index: {}]
  %s4 = sld [smem:[#allocation0]]
  $region53: #{tpu_custom_call.1} parent=0
    _
  %s6 = ssub.s32 1, %s4
  %s7 = scalar_select 0, %s6, %s4
  $region1: #{tpu_custom_call.1} parent=0
    #allocation2 [shape = 'u8[65536]{0}', space=vmem, size = 0x10000, scoped, tag = 'input window, operand 0']
    #allocation3 [shape = 's32[2]{0}', space=sflag, size = 0x8, scoped, tag = 'scoped memory for tpu_custom_call.1']
    #allocation4 [shape = 's32[2]{0}', space=sflag, size = 0x8, scoped, tag = 'scoped memory for tpu_custom_call.1']
    #allocation5 [shape = 'u8[32768]{0}', space=vmem, size = 0x8000, scoped, tag = 'input window, operand 1, single buffered']
    #allocation6 [shape = 's32[1]{0}', space=sflag, size = 0x4, scoped, tag = 'scoped memory for tpu_custom_call.1']
    #allocation7 [shape = 'u8[65536]{0}', space=vmem, size = 0x10000, scoped, tag = 'output window, operand 0']
    %8 = vsyncpa [#allocation3], 0
    %s9 = scalar_lea.sflag [#allocation3], 1
    %10 = vsyncpa %s9, 0
    %11 = vsyncpa [#allocation6], 0
    %12 = vsyncpa [#allocation4], 0
    %s13 = scalar_lea.sflag [#allocation4], 1
    %14 = vsyncpa %s13, 0
    loop: start=0, step=1, limit=5
    $region2: #{tpu_custom_call.1} parent=1 // loop_pre_header
      _
    $region3: #{tpu_custom_call.1} parent=1 // loop_header
      %s16 = sphi 0, %s20
      %p17 = scmp.ge.s32.totalorder %s16, 5
      %s26 = sphi 0, %s28
      %s29 = sphi 0, %s26
      %s30 = sphi 0, %s29
      %s46 = sphi 0, %s30
      %s50 = sphi 0, %s50
      %s52 = sphi 0, %s50
      %s53 = sphi 0, %s52
      %s67 = sphi 0, %s53
      %s71 = sphi 0, %s71
      %s73 = sphi 0, %s71
      %s74 = sphi 0, %s73
      %s88 = sphi 0, %s74
      %s94 = sphi 0, %s96
      %s97 = sphi 0, %s94
      %s98 = sphi 0, %s97
      %s114 = sphi 0, %s98
    $region4: #{tpu_custom_call.1} parent=1 // loop_header_branch
      %19 = sbr.rel (%p17) target = $region8
    $region5: #{tpu_custom_call.1} parent=1 // loop_body
      %s21 = ssub.s32 %s16, 1
      %s22 = ssub.s32 %s16, 2
      %s23 = sadd.s32 %s16, 1
      %s24 = ssub.s32 %s16, %s23
      %p25 = scmp.eq.s32.totalorder %s24, 0
      %s27 = sadd.s32 %s26, 1
      %s28 = scalar_select %p25, %s26, %s27
      %p31 = pneg %p25
      %p32 = scmp.eq.s32.totalorder %s16, 2
      %p33 = por %p31, %p32
      %p34 = scmp.ne.s32.totalorder %s26, %s29
      %p35 = scmp.eq.s32.totalorder %s16, 0
      %p36 = por %p34, %p35
      %p37 = scmp.ne.s32.totalorder %s26, %s29
      %p38 = scmp.eq.s32.totalorder %s21, 2
      %p39 = por %p37, %p38
      %p40 = scmp.ne.s32.totalorder %s29, %s30
      %p41 = scmp.eq.s32.totalorder %s21, 0
      %p42 = por %p40, %p41
      %p43 = scmp.ne.s32.totalorder %s29, %s30
      %p44 = scmp.eq.s32.totalorder %s22, 2
      %p45 = por %p43, %p44
      %p47 = scmp.ne.s32.totalorder %s30, %s46
      %p48 = scmp.eq.s32.totalorder %s22, 0
      %p49 = por %p47, %p48
      %s51 = sadd.s32 %s50, 1
      %p54 = scmp.eq.s32.totalorder %s16, 2
      %p55 = scmp.ne.s32.totalorder %s50, %s52
      %p56 = scmp.eq.s32.totalorder %s16, 0
      %p57 = por %p55, %p56
      %p58 = scmp.ne.s32.totalorder %s50, %s52
      %p59 = scmp.eq.s32.totalorder %s21, 2
      %p60 = por %p58, %p59
      %p61 = scmp.ne.s32.totalorder %s52, %s53
      %p62 = scmp.eq.s32.totalorder %s21, 0
      %p63 = por %p61, %p62
      %p64 = scmp.ne.s32.totalorder %s52, %s53
      %p65 = scmp.eq.s32.totalorder %s22, 2
      %p66 = por %p64, %p65
      %p68 = scmp.ne.s32.totalorder %s53, %s67
      %p69 = scmp.eq.s32.totalorder %s22, 0
      %p70 = por %p68, %p69
      %s72 = sadd.s32 %s71, 1
      %p75 = scmp.eq.s32.totalorder %s16, 2
      %p76 = scmp.ne.s32.totalorder %s71, %s73
      %p77 = scmp.eq.s32.totalorder %s16, 0
      %p78 = por %p76, %p77
      %p79 = scmp.ne.s32.totalorder %s71, %s73
      %p80 = scmp.eq.s32.totalorder %s21, 2
      %p81 = por %p79, %p80
      %p82 = scmp.ne.s32.totalorder %s73, %s74
      %p83 = scmp.eq.s32.totalorder %s21, 0
      %p84 = por %p82, %p83
      %p85 = scmp.ne.s32.totalorder %s73, %s74
      %p86 = scmp.eq.s32.totalorder %s22, 2
      %p87 = por %p85, %p86
      %p89 = scmp.ne.s32.totalorder %s74, %s88
      %p90 = scmp.eq.s32.totalorder %s22, 0
      %p91 = por %p89, %p90
      %s92 = ssub.s32 %s16, %s23
      %p93 = scmp.eq.s32.totalorder %s92, 0
      %s95 = sadd.s32 %s94, 1
      %s96 = scalar_select %p93, %s94, %s95
      %p99 = pneg %p93
      %p100 = scmp.eq.s32.totalorder %s16, 2
      %p101 = por %p99, %p100
      %p102 = scmp.ne.s32.totalorder %s94, %s97
      %p103 = scmp.eq.s32.totalorder %s16, 0
      %p104 = por %p102, %p103
      %p105 = scmp.ne.s32.totalorder %s94, %s97
      %p106 = scmp.eq.s32.totalorder %s21, 2
      %p107 = por %p105, %p106
      %p108 = scmp.ne.s32.totalorder %s97, %s98
      %p109 = scmp.eq.s32.totalorder %s21, 0
      %p110 = por %p108, %p109
      %p111 = scmp.ne.s32.totalorder %s97, %s98
      %p112 = scmp.eq.s32.totalorder %s22, 2
      %p113 = por %p111, %p112
      %p115 = scmp.ne.s32.totalorder %s98, %s114
      %p116 = scmp.eq.s32.totalorder %s22, 0
      %p117 = por %p115, %p116
      %p118 = scmp.le.s32.totalorder 1, %s16
      %p119 = scmp.lt.s32.totalorder %s16, 4
      %p120 = pnand %p118, %p119
      %p121 = pneg %p120
      // Predicated region
      $region9: #{tpu_custom_call.1} parent=5 // pred_check
        _
      $region10: #{tpu_custom_call.1} parent=5 // pred_check_branch
        %123 = sbr.rel (%p120) target = $region12
      $region11: #{tpu_custom_call.1} parent=5 // pred_region
        %s124 = ssub.s32 %s16, 1
        // Predicated region
        $region13: #{tpu_custom_call.1} parent=11 // pred_check
          %p125 = pneg %p63
        $region14: #{tpu_custom_call.1} parent=11 // pred_check_branch
          %127 = sbr.rel (%p125) target = $region16
        $region15: #{tpu_custom_call.1} parent=11 // pred_region
          %s129 = ssub.s32 1024, 1024
          %130 = vsyncadd [#allocation6], %s129
          %s131 = sshll.u32 [#allocation5], 4
          %s132 = int_to_ptr.vmem [resolvable:$true] %s131
          %137 = dma.hbm_to_vmem [thread:$0]  %s1, 1024, %s132, [#allocation6], 64, 64, 4
        $region16: #{tpu_custom_call.1} parent=11 // pred_fallthru
          _
        // Predicated region
        $region17: #{tpu_custom_call.1} parent=11 // pred_check
          %p138 = pneg %p84
        $region18: #{tpu_custom_call.1} parent=11 // pred_check_branch
          %140 = sbr.rel (%p138) target = $region20
        $region19: #{tpu_custom_call.1} parent=11 // pred_region
          _
        $region20: #{tpu_custom_call.1} parent=11 // pred_fallthru
          _
      $region12: #{tpu_custom_call.1} parent=5 // pred_fallthru
        _
      %p141 = scmp.lt.s32.totalorder %s16, 3
      // Predicated region
      $region21: #{tpu_custom_call.1} parent=5 // pred_check
        %p142 = pneg %p141
      $region22: #{tpu_custom_call.1} parent=5 // pred_check_branch
        %144 = sbr.rel (%p142) target = $region24
      $region23: #{tpu_custom_call.1} parent=5 // pred_region
        // Predicated region
        $region25: #{tpu_custom_call.1} parent=23 // pred_check
          %p145 = pneg %p36
        $region26: #{tpu_custom_call.1} parent=23 // pred_check_branch
          %147 = sbr.rel (%p145) target = $region28
        $region27: #{tpu_custom_call.1} parent=23 // pred_region
          %s148 = sand.u32 %s26, 1
          %s149 = scalar_lea.sflag [#allocation3], %s148
          %s150 = sand.u32 %s26, 1
          %s151 = smul.addr %s150, 64
          %s152 = scalar_lea.vmem [#allocation2], %s151
          %s153 = smul.u32 16, %s16
          %s155 = ssub.s32 1024, 1024
          %156 = vsyncadd %s149, %s155
          %s157 = smul.addr %s153, 64
          %s158 = scalar_lea.hbm %s0, %s157
          %s159 = sshll.u32 %s152, 4
          %s160 = int_to_ptr.vmem [resolvable:$true] %s159
          %165 = dma.hbm_to_vmem [thread:$0]  %s158, 1024, %s160, %s149, 64, 64, 4
        $region28: #{tpu_custom_call.1} parent=23 // pred_fallthru
          _
      $region24: #{tpu_custom_call.1} parent=5 // pred_fallthru
        _
      %p166 = scmp.le.s32.totalorder 1, %s16
      %p167 = scmp.lt.s32.totalorder %s16, 4
      %p168 = pnand %p166, %p167
      %p169 = pneg %p168
      // Predicated region
      $region29: #{tpu_custom_call.1} parent=5 // pred_check
        _
      $region30: #{tpu_custom_call.1} parent=5 // pred_check_branch
        %171 = sbr.rel (%p168) target = $region32
      $region31: #{tpu_custom_call.1} parent=5 // pred_region
        %s172 = ssub.s32 %s16, 1
        %s173 = sand.u32 %s29, 1
        %s174 = scalar_lea.sflag [#allocation3], %s173
        %s175 = sand.u32 %s29, 1
        %s176 = smul.addr %s175, 64
        %s177 = scalar_lea.vmem [#allocation2], %s176
        // Predicated region
        $region33: #{tpu_custom_call.1} parent=31 // pred_check
          %p178 = pneg %p42
        $region34: #{tpu_custom_call.1} parent=31 // pred_check_branch
          %180 = sbr.rel (%p178) target = $region36
        $region35: #{tpu_custom_call.1} parent=31 // pred_region
          %181 = dma.done %s174, 1024
        $region36: #{tpu_custom_call.1} parent=31 // pred_fallthru
          _
        // Predicated region
        $region37: #{tpu_custom_call.1} parent=31 // pred_check
          %p182 = pneg %p63
        $region38: #{tpu_custom_call.1} parent=31 // pred_check_branch
          %184 = sbr.rel (%p182) target = $region40
        $region39: #{tpu_custom_call.1} parent=31 // pred_region
          %185 = dma.done [#allocation6], 1024
        $region40: #{tpu_custom_call.1} parent=31 // pred_fallthru
          _
        %s186 = sand.u32 %s29, 1
        %s187 = scalar_lea.sflag [#allocation3], %s186
        %s188 = sand.u32 %s29, 1
        %s189 = smul.addr %s188, 64
        %s190 = scalar_lea.vmem [#allocation2], %s189
        %p191 = pneg %p42
        %p192 = pneg %p39
        %p193 = pneg %p63
        %p194 = pneg %p60
        %p195 = pneg %p84
        %p196 = pneg %p81
        %p197 = pneg %p110
        %p198 = pneg %p107
        %s199 = sand.u32 %s97, 1
        %s200 = scalar_lea.sflag [#allocation4], %s199
        %s201 = sand.u32 %s97, 1
        %s202 = smul.addr %s201, 64
        %s203 = scalar_lea.vmem [#allocation7], %s202
        %s204 = smul.u32 16, %s21
        %s205 = smul.u32 16, %s21
        %v207 = vld [vmem:[%s177] sm:$0xf]
        %v208 = vld [vmem:[%s177 + $0x4] sm:$0xf]
        %v209 = vld [vmem:[%s177 + $0x8] sm:$0xf]
        %v210 = vld [vmem:[%s177 + $0xc] sm:$0xf]
        %v211 = vld [vmem:[%s177 + $0x10] sm:$0xf]
        %v212 = vld [vmem:[%s177 + $0x14] sm:$0xf]
        %v213 = vld [vmem:[%s177 + $0x18] sm:$0xf]
        %v214 = vld [vmem:[%s177 + $0x1c] sm:$0xf]
        %v215 = vld [vmem:[%s177 + $0x20] sm:$0xf]
        %v216 = vld [vmem:[%s177 + $0x24] sm:$0xf]
        %v217 = vld [vmem:[%s177 + $0x28] sm:$0xf]
        %v218 = vld [vmem:[%s177 + $0x2c] sm:$0xf]
        %v219 = vld [vmem:[%s177 + $0x30] sm:$0xf]
        %v220 = vld [vmem:[%s177 + $0x34] sm:$0xf]
        %v221 = vld [vmem:[%s177 + $0x38] sm:$0xf]
        %v222 = vld [vmem:[%s177 + $0x3c] sm:$0xf]
        %v223 = vld [vmem:[#allocation5] sm:$0xf]
        %v224 = vld [vmem:[#allocation5 + $0x4] sm:$0xf]
        %v225 = vld [vmem:[#allocation5 + $0x8] sm:$0xf]
        %v226 = vld [vmem:[#allocation5 + $0xc] sm:$0xf]
        %v227 = vld [vmem:[#allocation5 + $0x10] sm:$0xf]
        %v228 = vld [vmem:[#allocation5 + $0x14] sm:$0xf]
        %v229 = vld [vmem:[#allocation5 + $0x18] sm:$0xf]
        %v230 = vld [vmem:[#allocation5 + $0x1c] sm:$0xf]
        %v231 = vld [vmem:[#allocation5 + $0x20] sm:$0xf]
        %v232 = vld [vmem:[#allocation5 + $0x24] sm:$0xf]
        %v233 = vld [vmem:[#allocation5 + $0x28] sm:$0xf]
        %v234 = vld [vmem:[#allocation5 + $0x2c] sm:$0xf]
        %v235 = vld [vmem:[#allocation5 + $0x30] sm:$0xf]
        %v236 = vld [vmem:[#allocation5 + $0x34] sm:$0xf]
        %v237 = vld [vmem:[#allocation5 + $0x38] sm:$0xf]
        %v238 = vld [vmem:[#allocation5 + $0x3c] sm:$0xf]
        %v255 = vunpack.c.l.b16 %v207
        %v256 = vunpack.c.l.b16 %v208
        %v257 = vunpack.c.l.b16 %v209
        %v258 = vunpack.c.l.b16 %v210
        %v259 = vunpack.c.l.b16 %v211
        %v260 = vunpack.c.l.b16 %v212
        %v261 = vunpack.c.l.b16 %v213
        %v262 = vunpack.c.l.b16 %v214
        %v263 = vunpack.c.l.b16 %v215
        %v264 = vunpack.c.l.b16 %v216
        %v265 = vunpack.c.l.b16 %v217
        %v266 = vunpack.c.l.b16 %v218
        %v267 = vunpack.c.l.b16 %v219
        %v268 = vunpack.c.l.b16 %v220
        %v269 = vunpack.c.l.b16 %v221
        %v270 = vunpack.c.l.b16 %v222
        %v271 = vpack.c.b16 %v256, %v255
        %v272 = vpack.c.b16 %v258, %v257
        %v273 = vpack.c.b16 %v260, %v259
        %v274 = vpack.c.b16 %v262, %v261
        %v275 = vpack.c.b16 %v264, %v263
        %v276 = vpack.c.b16 %v266, %v265
        %v277 = vpack.c.b16 %v268, %v267
        %v278 = vpack.c.b16 %v270, %v269
        %v303 = vunpack.c.l.b16 %v223
        %v304 = vunpack.c.l.b16 %v224
        %v305 = vunpack.c.l.b16 %v225
        %v306 = vunpack.c.l.b16 %v226
        %v307 = vunpack.c.l.b16 %v227
        %v308 = vunpack.c.l.b16 %v228
        %v309 = vunpack.c.l.b16 %v229
        %v310 = vunpack.c.l.b16 %v230
        %v311 = vunpack.c.l.b16 %v231
        %v312 = vunpack.c.l.b16 %v232
        %v313 = vunpack.c.l.b16 %v233
        %v314 = vunpack.c.l.b16 %v234
        %v315 = vunpack.c.l.b16 %v235
        %v316 = vunpack.c.l.b16 %v236
        %v317 = vunpack.c.l.b16 %v237
        %v318 = vunpack.c.l.b16 %v238
        %v319 = vpack.c.b16 %v304, %v303
        %v320 = vpack.c.b16 %v306, %v305
        %v321 = vpack.c.b16 %v308, %v307
        %v322 = vpack.c.b16 %v310, %v309
        %v323 = vpack.c.b16 %v312, %v311
        %v324 = vpack.c.b16 %v314, %v313
        %v325 = vpack.c.b16 %v316, %v315
        %v326 = vpack.c.b16 %v318, %v317
        %335 = vmatprep.subr.bf16.mxu0 0
        %336 = vmatpush1.bf16.msra.mxu0 %v319
        %337 = vmatprep.subr.bf16.mxu0 0
        %338 = vmatpush1.bf16.msra.mxu0 %v320
        %339 = vmatprep.subr.bf16.mxu0 0
        %340 = vmatpush1.bf16.msra.mxu0 %v321
        %341 = vmatprep.subr.bf16.mxu0 0
        %342 = vmatpush1.bf16.msra.mxu0 %v322
        %343 = vmatprep.subr.bf16.mxu0 0
        %344 = vmatpush1.bf16.msra.mxu0 %v323
        %345 = vmatprep.subr.bf16.mxu0 0
        %346 = vmatpush1.bf16.msra.mxu0 %v324
        %347 = vmatprep.subr.bf16.mxu0 0
        %348 = vmatpush1.bf16.msra.mxu0 %v325
        %349 = vmatprep.subr.bf16.mxu0 0
        %350 = vmatpush1.bf16.msra.mxu0 %v326
        %351 = vmatprep.subr.bf16.mxu0 0
        %352 = vmatpush1.bf16.msra.mxu0 0
        %353 = vmatprep.subr.bf16.mxu0 0
        %354 = vmatpush1.bf16.msra.mxu0 0
        %355 = vmatprep.subr.bf16.mxu0 0
        %356 = vmatpush1.bf16.msra.mxu0 0
        %357 = vmatprep.subr.bf16.mxu0 0
        %358 = vmatpush1.bf16.msra.mxu0 0
        %359 = vmatprep.subr.bf16.mxu0 0
        %360 = vmatpush1.bf16.msra.mxu0 0
        %361 = vmatprep.subr.bf16.mxu0 0
        %362 = vmatpush1.bf16.msra.mxu0 0
        %363 = vmatprep.subr.bf16.mxu0 0
        %364 = vmatpush1.bf16.msra.mxu0 0
        %365 = vmatprep.subr.bf16.mxu0 0
        %366 = vmatpush1.bf16.msra.mxu0 0
        %367 = vmatprep.mubr.bf16.mxu0 0
        %368 = vmatmul.mubr.bf16.gmra.mrb[0].mxu0 %v271
        %v369 = vpop.f32.mrb[0].mxu0
        %v370 = vadd.f32 0.0, %v369
        %v371 = vpop.f32.mrb[0].mxu0
        %v372 = vpop.f32.mrb[0].mxu0
        %v373 = vadd.f32 0.0, %v372
        %v374 = vpop.f32.mrb[0].mxu0
        %375 = vmatprep.mubr.bf16.mxu0 0
        %376 = vmatmul.mubr.bf16.gmra.mrb[0].mxu0 %v272
        %v377 = vpop.f32.mrb[0].mxu0
        %v378 = vadd.f32 0.0, %v377
        %v379 = vpop.f32.mrb[0].mxu0
        %v380 = vpop.f32.mrb[0].mxu0
        %v381 = vadd.f32 0.0, %v380
        %v382 = vpop.f32.mrb[0].mxu0
        %383 = vmatprep.mubr.bf16.mxu0 0
        %384 = vmatmul.mubr.bf16.gmra.mrb[0].mxu0 %v273
        %v385 = vpop.f32.mrb[0].mxu0
        %v386 = vadd.f32 0.0, %v385
        %v387 = vpop.f32.mrb[0].mxu0
        %v388 = vpop.f32.mrb[0].mxu0
        %v389 = vadd.f32 0.0, %v388
        %v390 = vpop.f32.mrb[0].mxu0
        %391 = vmatprep.mubr.bf16.mxu0 0
        %392 = vmatmul.mubr.bf16.gmra.mrb[0].mxu0 %v274
        %v393 = vpop.f32.mrb[0].mxu0
        %v394 = vadd.f32 0.0, %v393
        %v395 = vpop.f32.mrb[0].mxu0
        %v396 = vpop.f32.mrb[0].mxu0
        %v397 = vadd.f32 0.0, %v396
        %v398 = vpop.f32.mrb[0].mxu0
        %399 = vmatprep.mubr.bf16.mxu0 0
        %400 = vmatmul.mubr.bf16.gmra.mrb[0].mxu0 %v275
        %v401 = vpop.f32.mrb[0].mxu0
        %v402 = vadd.f32 0.0, %v401
        %v403 = vpop.f32.mrb[0].mxu0
        %v404 = vpop.f32.mrb[0].mxu0
        %v405 = vadd.f32 0.0, %v404
        %v406 = vpop.f32.mrb[0].mxu0
        %407 = vmatprep.mubr.bf16.mxu0 0
        %408 = vmatmul.mubr.bf16.gmra.mrb[0].mxu0 %v276
        %v409 = vpop.f32.mrb[0].mxu0
        %v410 = vadd.f32 0.0, %v409
        %v411 = vpop.f32.mrb[0].mxu0
        %v412 = vpop.f32.mrb[0].mxu0
        %v413 = vadd.f32 0.0, %v412
        %v414 = vpop.f32.mrb[0].mxu0
        %415 = vmatprep.mubr.bf16.mxu0 0
        %416 = vmatmul.mubr.bf16.gmra.mrb[0].mxu0 %v277
        %v417 = vpop.f32.mrb[0].mxu0
        %v418 = vadd.f32 0.0, %v417
        %v419 = vpop.f32.mrb[0].mxu0
        %v420 = vpop.f32.mrb[0].mxu0
        %v421 = vadd.f32 0.0, %v420
        %v422 = vpop.f32.mrb[0].mxu0
        %423 = vmatprep.mubr.bf16.mxu0 0
        %424 = vmatmul.mubr.bf16.gmra.mrb[0].mxu0 %v278
        %v425 = vpop.f32.mrb[0].mxu0
        %v426 = vadd.f32 0.0, %v425
        %v427 = vpop.f32.mrb[0].mxu0
        %v428 = vpop.f32.mrb[0].mxu0
        %v429 = vadd.f32 0.0, %v428
        %v430 = vpop.f32.mrb[0].mxu0
        %431 = vdwg.mxu0
        %v432 = vpack.c.bf16 %v373, %v370
        %v433 = vpack.c.bf16 %v381, %v378
        %v434 = vpack.c.bf16 %v389, %v386
        %v435 = vpack.c.bf16 %v397, %v394
        %v436 = vpack.c.bf16 %v405, %v402
        %v437 = vpack.c.bf16 %v413, %v410
        %v438 = vpack.c.bf16 %v421, %v418
        %v439 = vpack.c.bf16 %v429, %v426
        %v448 = vunpack.c.l.b16 %v432
        %v449 = vunpack.c.h.b16 %v432
        %v450 = vunpack.c.l.b16 %v433
        %v451 = vunpack.c.h.b16 %v433
        %v452 = vunpack.c.l.b16 %v434
        %v453 = vunpack.c.h.b16 %v434
        %v454 = vunpack.c.l.b16 %v435
        %v455 = vunpack.c.h.b16 %v435
        %v456 = vunpack.c.l.b16 %v436
        %v457 = vunpack.c.h.b16 %v436
        %v458 = vunpack.c.l.b16 %v437
        %v459 = vunpack.c.h.b16 %v437
        %v460 = vunpack.c.l.b16 %v438
        %v461 = vunpack.c.h.b16 %v438
        %v462 = vunpack.c.l.b16 %v439
        %v463 = vunpack.c.h.b16 %v439
        %v464 = vpack.c.b16 %v448, %v448
        %v465 = vpack.c.b16 %v449, %v449
        %v466 = vpack.c.b16 %v450, %v450
        %v467 = vpack.c.b16 %v451, %v451
        %v468 = vpack.c.b16 %v452, %v452
        %v469 = vpack.c.b16 %v453, %v453
        %v470 = vpack.c.b16 %v454, %v454
        %v471 = vpack.c.b16 %v455, %v455
        %v472 = vpack.c.b16 %v456, %v456
        %v473 = vpack.c.b16 %v457, %v457
        %v474 = vpack.c.b16 %v458, %v458
        %v475 = vpack.c.b16 %v459, %v459
        %v476 = vpack.c.b16 %v460, %v460
        %v477 = vpack.c.b16 %v461, %v461
        %v478 = vpack.c.b16 %v462, %v462
        %v479 = vpack.c.b16 %v463, %v463
        %496 = vst [vmem:[%s203] sm:$0xf] %v464
        %497 = vst [vmem:[%s203 + $0x4] sm:$0xf] %v465
        %498 = vst [vmem:[%s203 + $0x8] sm:$0xf] %v466
        %499 = vst [vmem:[%s203 + $0xc] sm:$0xf] %v467
        %500 = vst [vmem:[%s203 + $0x10] sm:$0xf] %v468
        %501 = vst [vmem:[%s203 + $0x14] sm:$0xf] %v469
        %502 = vst [vmem:[%s203 + $0x18] sm:$0xf] %v470
        %503 = vst [vmem:[%s203 + $0x1c] sm:$0xf] %v471
        %504 = vst [vmem:[%s203 + $0x20] sm:$0xf] %v472
        %505 = vst [vmem:[%s203 + $0x24] sm:$0xf] %v473
        %506 = vst [vmem:[%s203 + $0x28] sm:$0xf] %v474
        %507 = vst [vmem:[%s203 + $0x2c] sm:$0xf] %v475
        %508 = vst [vmem:[%s203 + $0x30] sm:$0xf] %v476
        %509 = vst [vmem:[%s203 + $0x34] sm:$0xf] %v477
        %510 = vst [vmem:[%s203 + $0x38] sm:$0xf] %v478
        %511 = vst [vmem:[%s203 + $0x3c] sm:$0xf] %v479
        %s512 = sand.u32 %s97, 1
        %s513 = scalar_lea.sflag [#allocation4], %s512
        %s514 = sand.u32 %s97, 1
        %s515 = smul.addr %s514, 64
        %s516 = scalar_lea.vmem [#allocation7], %s515
        // Predicated region
        $region41: #{tpu_custom_call.1} parent=31 // pred_check
          %p517 = pneg %p107
        $region42: #{tpu_custom_call.1} parent=31 // pred_check_branch
          %519 = sbr.rel (%p517) target = $region44
        $region43: #{tpu_custom_call.1} parent=31 // pred_region
          %s520 = smul.u32 16, %s21
          %s522 = ssub.s32 1024, 1024
          %523 = vsyncadd %s513, %s522
          %s524 = smul.addr %s520, 64
          %s525 = scalar_lea.hbm %s3, %s524
          %s526 = sshll.u32 %s516, 4
          %s527 = int_to_ptr.vmem [resolvable:$true] %s526
          %532 = dma.vmem_to_hbm [thread:$0]  %s527, 1024, %s525, %s513, 64, 64, 4
        $region44: #{tpu_custom_call.1} parent=31 // pred_fallthru
          _
      $region32: #{tpu_custom_call.1} parent=5 // pred_fallthru
        _
      %p533 = scmp.le.s32.totalorder 2, %s16
      // Predicated region
      $region45: #{tpu_custom_call.1} parent=5 // pred_check
        %p534 = pneg %p533
      $region46: #{tpu_custom_call.1} parent=5 // pred_check_branch
        %536 = sbr.rel (%p534) target = $region48
      $region47: #{tpu_custom_call.1} parent=5 // pred_region
        %s537 = ssub.s32 %s16, 2
        // Predicated region
        $region49: #{tpu_custom_call.1} parent=47 // pred_check
          %p538 = pneg %p113
        $region50: #{tpu_custom_call.1} parent=47 // pred_check_branch
          %540 = sbr.rel (%p538) target = $region52
        $region51: #{tpu_custom_call.1} parent=47 // pred_region
          %s541 = sand.u32 %s98, 1
          %s542 = scalar_lea.sflag [#allocation4], %s541
          %s543 = sand.u32 %s98, 1
          %s544 = smul.addr %s543, 64
          %s545 = scalar_lea.vmem [#allocation7], %s544
          %546 = dma.done %s542, 1024
        $region52: #{tpu_custom_call.1} parent=47 // pred_fallthru
          _
      $region48: #{tpu_custom_call.1} parent=5 // pred_fallthru
        _
    $region6: #{tpu_custom_call.1} parent=1 // loop_footer
      %s20 = sadd.s32 1, %s16
    $region7: #{tpu_custom_call.1} parent=1 // loop_footer_branch
      %15 = sbr.rel target = $region3
    $region8: #{tpu_custom_call.1} parent=1 // loop_exit
      _
    %547 = vsyncpa [#allocation3], 1
    %s548 = scalar_lea.sflag [#allocation3], 1
    %549 = vsyncpa %s548, 1
    %550 = vsyncpa [#allocation6], 1
    %551 = vsyncpa [#allocation4], 1
    %s552 = scalar_lea.sflag [#allocation4], 1
    %553 = vsyncpa %s552, 1

</llo_original>
